<compile_context>
chip_gen: v7x
topology: tpu7x:2x2x1
jax: 0.10.0
libtpu: 0.0.40
codegen_flags: <defaults>
</compile_context>

<pallas_src>
import numpy as np
import jax
import jax.numpy as jnp
from jax.experimental import pallas as pl
from jax.experimental.pallas import tpu as pltpu

IMAGE_TOKEN_INDEX = -200  # LLaVA / FastVLM image-token sentinel

_N_INFLIGHT = 8  # row-gather DMAs kept in flight per block (power of 2)


def _make_gather_kernel(block_tokens):
    T = int(block_tokens)
    NF = min(_N_INFLIGHT, T)

    def kernel(ids_smem, mask_ref, table_ref, out_ref, buf_ref, sems):
        # ids_smem  : (n_pad,) int32, SMEM  -- safe (pad-substituted, clamped) ids
        # mask_ref  : (T, 1) int32, VMEM    -- 1 where token is the image sentinel
        # table_ref : (V, H), HBM (pl.ANY)  -- full table; never copied wholesale
        # out_ref   : (T, H), VMEM          -- output block
        # buf_ref   : (T, H), VMEM scratch  -- gather landing buffer
        # sems      : (NF,) DMA semaphores
        b = pl.program_id(0)
        base = b * T

        def row_dma(t):
            row = ids_smem[base + t]
            return pltpu.make_async_copy(
                table_ref.at[pl.ds(row, 1), :],
                buf_ref.at[pl.ds(t, 1), :],
                sems.at[t % NF])

        # Prologue: fill the in-flight window.
        @pl.loop(0, NF)
        def _(t):
            row_dma(t).start()

        # Steady state: retire DMA t, issue DMA t + NF.
        @pl.loop(0, T)
        def _(t):
            row_dma(t).wait()

            @pl.when(t + NF < T)
            def _():
                row_dma(t + NF).start()

        # Exact zeros for image-token rows (select, never multiply-by-zero).
        is_img = mask_ref[...] != 0                      # (T, 1) bool
        out_ref[...] = jnp.where(is_img,
                                 jnp.zeros((), out_ref.dtype),
                                 buf_ref[...])

    return kernel


def fastvlm_embed(input_ids, emb_table, pad_token_id, *, block_tokens=256):
    """Pallas implementation of FastVLMEmbeddingWrapper.forward.

    input_ids : [B, S] int32 (may contain IMAGE_TOKEN_INDEX / out-of-range ids)
    emb_table : [V, H] (any float dtype; output dtype matches the table)
    returns   : [B, S, H], dtype == emb_table.dtype
    """
    B, S = input_ids.shape
    V, H = emb_table.shape
    n_tok = B * S

    # Token-block size: multiple of 8 (dense sublanes), no larger than needed.
    T = max(8, min(int(block_tokens), ((n_tok + 7) // 8) * 8))
    n_blocks = pl.cdiv(n_tok, T)
    n_pad = n_blocks * T
    NF = min(_N_INFLIGHT, T)

    # Cheap scalar pre-processing in the wrapper: safe ids + image mask.
    ids = input_ids.reshape(n_tok).astype(jnp.int32)
    img_mask = ids == IMAGE_TOKEN_INDEX
    safe_ids = jnp.clip(jnp.where(img_mask, jnp.int32(pad_token_id), ids), 0, V - 1)

    if n_pad != n_tok:
        # Only the tiny id/mask arrays are padded; the (n_tok, H) output is not.
        safe_ids = jnp.pad(safe_ids, (0, n_pad - n_tok))   # row 0 is always valid
        img_mask = jnp.pad(img_mask, (0, n_pad - n_tok))
    mask2d = img_mask.astype(jnp.int32).reshape(n_pad, 1)

    kernel = _make_gather_kernel(T)

    out = pl.pallas_call(
        kernel,
        out_shape=jax.ShapeDtypeStruct((n_tok, H), emb_table.dtype),
        grid_spec=pltpu.PrefetchScalarGridSpec(
            num_scalar_prefetch=1,               # safe_ids -> SMEM, drives the DMAs
            grid=(n_blocks,),
            in_specs=[
                # (T, 1) image-mask block: tokens on the sublane axis.
                pl.BlockSpec((T, 1), lambda b, ids_ref: (b, 0)),
                # Embedding table stays in HBM; rows are DMA-gathered manually.
                pl.BlockSpec(memory_space=pl.ANY),
            ],
            out_specs=pl.BlockSpec((T, H), lambda b, ids_ref: (b, 0)),
            scratch_shapes=[
                pltpu.VMEM((T, H), emb_table.dtype),
                pltpu.SemaphoreType.DMA((NF,)),
            ],
        ),
        compiler_params=pltpu.CompilerParams(
            dimension_semantics=("arbitrary",)),
    )(safe_ids, mask2d, emb_table)

    return out.reshape(B, S, H)


def _reference(input_ids, emb_table, pad_token_id):
    """Pure-JAX reference mirroring the PyTorch forward."""
    V = emb_table.shape[0]
    image_mask = input_ids == IMAGE_TOKEN_INDEX
    safe = jnp.where(image_mask, pad_token_id, input_ids)
    safe = jnp.clip(safe, 0, V - 1)
    emb = emb_table[safe]
    return jnp.where(image_mask[..., None],
                     jnp.zeros((), emb_table.dtype), emb)


if __name__ == "__main__":
    B, S = 2, 8          # batch, sequence
    V, H = 64, 128       # vocab_size ("embedding_size" in the module), hidden dim
    pad_token_id = 0

    key = jax.random.PRNGKey(0)
    k_emb, k_ids = jax.random.split(key)

    emb_table = jax.random.normal(k_emb, (V, H), dtype=jnp.float32)

    input_ids = jax.random.randint(k_ids, (B, S), 0, V, dtype=jnp.int32)
    # inject image-token sentinels and out-of-range ids (exercise mask + clamp)
    input_ids = input_ids.at[0, 2].set(IMAGE_TOKEN_INDEX)
    input_ids = input_ids.at[1, 5].set(IMAGE_TOKEN_INDEX)
    input_ids = input_ids.at[0, 7].set(V + 37)   # clamped to V-1
    input_ids = input_ids.at[1, 0].set(-3)       # clamped to 0

    out = fastvlm_embed(input_ids, emb_table, pad_token_id)
    out = jax.block_until_ready(out)

    ref = _reference(input_ids, emb_table, pad_token_id)
    np.testing.assert_allclose(np.asarray(out), np.asarray(ref),
                               rtol=1e-6, atol=1e-6)

    print("KERNEL_OK")
</pallas_src>

<mosaic_0001>
module attributes {stable_mosaic.version = 11 : i64} {
  func.func @kernel(%arg0: i32, %arg1: memref<16xi32, #tpu.memory_space<smem>>, %arg2: memref<16x1xi32, #tpu.memory_space<vmem>>, %arg3: memref<64x128xf32, #tpu.memory_space<any>>, %arg4: memref<16x128xf32, #tpu.memory_space<vmem>>, %arg5: memref<16x128xf32, #tpu.memory_space<vmem>>, %arg6: memref<8x!tpu.dma_semaphore, #tpu.memory_space<semaphore_mem>>) attributes {dimension_semantics = [#tpu.dimension_semantics<arbitrary>], iteration_bounds = array<i64: 1>, scalar_prefetch = 1 : i64, scratch_operands = 2 : i64, tpu.core_type = #tpu.core_type<tc>, window_params = [{transform_indices = @transform_0, window_bounds = array<i64: 16, 1>}, {}, {transform_indices = @transform_2, window_bounds = array<i64: 16, 128>}]} {
    %c16_i32 = arith.constant 16 : i32
    %0 = arith.muli %arg0, %c16_i32 : i32
    %c0_i32 = arith.constant 0 : i32
    %c8_i32 = arith.constant 8 : i32
    %1 = arith.addi %c0_i32, %c8_i32 : i32
    %c1_i32 = arith.constant 1 : i32
    scf.for %arg7 = %c0_i32 to %1 step %c1_i32  : i32 {
      %c1_i32_11 = arith.constant 1 : i32
      %12 = arith.muli %arg7, %c1_i32_11 : i32
      %c0_i32_12 = arith.constant 0 : i32
      %13 = arith.addi %c0_i32_12, %12 : i32
      %14 = arith.addi %0, %13 : i32
      %15 = arith.index_cast %14 : i32 to index
      %16 = memref.load %arg1[%15] : memref<16xi32, #tpu.memory_space<smem>>
      %c8_i32_13 = arith.constant 8 : i32
      %c0_i32_14 = arith.constant 0 : i32
      %17 = arith.cmpi eq, %c8_i32_13, %c0_i32_14 : i32
      %c1_i32_15 = arith.constant 1 : i32
      %18 = arith.select %17, %c1_i32_15, %c8_i32_13 : i32
      %19 = arith.remsi %13, %18 : i32
      %c0_i32_16 = arith.constant 0 : i32
      %20 = arith.cmpi ne, %19, %c0_i32_16 : i32
      %c0_i32_17 = arith.constant 0 : i32
      %21 = arith.cmpi slt, %19, %c0_i32_17 : i32
      %c0_i32_18 = arith.constant 0 : i32
      %22 = arith.cmpi slt, %18, %c0_i32_18 : i32
      %23 = arith.xori %21, %22 : i1
      %24 = arith.andi %23, %20 : i1
      %25 = arith.addi %19, %18 : i32
      %26 = arith.select %24, %25, %19 : i32
      %c0_i32_19 = arith.constant 0 : i32
      %27 = tpu.memref_slice %arg3[%16, %c0_i32_19] : memref<64x128xf32, #tpu.memory_space<any>> -> memref<1x128xf32, #tpu.memory_space<any>>
      %c0_i32_20 = arith.constant 0 : i32
      %28 = tpu.memref_slice %arg5[%13, %c0_i32_20] : memref<16x128xf32, #tpu.memory_space<vmem>> -> memref<1x128xf32, #tpu.memory_space<vmem>>
      %29 = tpu.memref_slice %arg6[%26] : memref<8x!tpu.dma_semaphore, #tpu.memory_space<semaphore_mem>> -> memref<1x!tpu.dma_semaphore, #tpu.memory_space<semaphore_mem>>
      %30 = tpu.memref_squeeze %29 : memref<1x!tpu.dma_semaphore, #tpu.memory_space<semaphore_mem>> -> memref<!tpu.dma_semaphore, #tpu.memory_space<semaphore_mem>>
      tpu.enqueue_dma source(%27 : memref<1x128xf32, #tpu.memory_space<any>>) target(%28 : memref<1x128xf32, #tpu.memory_space<vmem>>) target_semaphore(%30 : memref<!tpu.dma_semaphore, #tpu.memory_space<semaphore_mem>>)
    }
    %c8_i32_0 = arith.constant 8 : i32
    %c0_i32_1 = arith.constant 0 : i32
    %c16_i32_2 = arith.constant 16 : i32
    %2 = arith.addi %c0_i32_1, %c16_i32_2 : i32
    %c1_i32_3 = arith.constant 1 : i32
    scf.for %arg7 = %c0_i32_1 to %2 step %c1_i32_3  : i32 {
      %c1_i32_11 = arith.constant 1 : i32
      %12 = arith.muli %arg7, %c1_i32_11 : i32
      %c0_i32_12 = arith.constant 0 : i32
      %13 = arith.addi %c0_i32_12, %12 : i32
      %14 = arith.addi %0, %13 : i32
      %15 = arith.index_cast %14 : i32 to index
      %16 = memref.load %arg1[%15] : memref<16xi32, #tpu.memory_space<smem>>
      %c8_i32_13 = arith.constant 8 : i32
      %c0_i32_14 = arith.constant 0 : i32
      %17 = arith.cmpi eq, %c8_i32_13, %c0_i32_14 : i32
      %c1_i32_15 = arith.constant 1 : i32
      %18 = arith.select %17, %c1_i32_15, %c8_i32_13 : i32
      %19 = arith.remsi %13, %18 : i32
      %c0_i32_16 = arith.constant 0 : i32
      %20 = arith.cmpi ne, %19, %c0_i32_16 : i32
      %c0_i32_17 = arith.constant 0 : i32
      %21 = arith.cmpi slt, %19, %c0_i32_17 : i32
      %c0_i32_18 = arith.constant 0 : i32
      %22 = arith.cmpi slt, %18, %c0_i32_18 : i32
      %23 = arith.xori %21, %22 : i1
      %24 = arith.andi %23, %20 : i1
      %25 = arith.addi %19, %18 : i32
      %26 = arith.select %24, %25, %19 : i32
      %c0_i32_19 = arith.constant 0 : i32
      %27 = tpu.memref_slice %arg3[%16, %c0_i32_19] : memref<64x128xf32, #tpu.memory_space<any>> -> memref<1x128xf32, #tpu.memory_space<any>>
      %c0_i32_20 = arith.constant 0 : i32
      %28 = tpu.memref_slice %arg5[%13, %c0_i32_20] : memref<16x128xf32, #tpu.memory_space<vmem>> -> memref<1x128xf32, #tpu.memory_space<vmem>>
      %29 = tpu.memref_slice %arg6[%26] : memref<8x!tpu.dma_semaphore, #tpu.memory_space<semaphore_mem>> -> memref<1x!tpu.dma_semaphore, #tpu.memory_space<semaphore_mem>>
      %30 = tpu.memref_squeeze %29 : memref<1x!tpu.dma_semaphore, #tpu.memory_space<semaphore_mem>> -> memref<!tpu.dma_semaphore, #tpu.memory_space<semaphore_mem>>
      tpu.wait_dma2 semaphore(%30 : memref<!tpu.dma_semaphore, #tpu.memory_space<semaphore_mem>>) src(%27 : memref<1x128xf32, #tpu.memory_space<any>>) dst(%28 : memref<1x128xf32, #tpu.memory_space<vmem>>)
      %c8_i32_21 = arith.constant 8 : i32
      %31 = arith.addi %13, %c8_i32_21 : i32
      %c16_i32_22 = arith.constant 16 : i32
      %32 = arith.cmpi slt, %31, %c16_i32_22 : i32
      %33 = arith.extui %32 : i1 to i32
      %c0_i32_23 = arith.constant 0 : i32
      %34 = arith.cmpi ne, %33, %c0_i32_23 : i32
      scf.if %34 {
        %c8_i32_24 = arith.constant 8 : i32
        %35 = arith.addi %13, %c8_i32_24 : i32
        %36 = arith.addi %0, %35 : i32
        %37 = arith.index_cast %36 : i32 to index
        %38 = memref.load %arg1[%37] : memref<16xi32, #tpu.memory_space<smem>>
        %c8_i32_25 = arith.constant 8 : i32
        %c0_i32_26 = arith.constant 0 : i32
        %39 = arith.cmpi eq, %c8_i32_25, %c0_i32_26 : i32
        %c1_i32_27 = arith.constant 1 : i32
        %40 = arith.select %39, %c1_i32_27, %c8_i32_25 : i32
        %41 = arith.remsi %35, %40 : i32
        %c0_i32_28 = arith.constant 0 : i32
        %42 = arith.cmpi ne, %41, %c0_i32_28 : i32
        %c0_i32_29 = arith.constant 0 : i32
        %43 = arith.cmpi slt, %41, %c0_i32_29 : i32
        %c0_i32_30 = arith.constant 0 : i32
        %44 = arith.cmpi slt, %40, %c0_i32_30 : i32
        %45 = arith.xori %43, %44 : i1
        %46 = arith.andi %45, %42 : i1
        %47 = arith.addi %41, %40 : i32
        %48 = arith.select %46, %47, %41 : i32
        %c0_i32_31 = arith.constant 0 : i32
        %49 = tpu.memref_slice %arg3[%38, %c0_i32_31] : memref<64x128xf32, #tpu.memory_space<any>> -> memref<1x128xf32, #tpu.memory_space<any>>
        %c0_i32_32 = arith.constant 0 : i32
        %50 = tpu.memref_slice %arg5[%35, %c0_i32_32] : memref<16x128xf32, #tpu.memory_space<vmem>> -> memref<1x128xf32, #tpu.memory_space<vmem>>
        %51 = tpu.memref_slice %arg6[%48] : memref<8x!tpu.dma_semaphore, #tpu.memory_space<semaphore_mem>> -> memref<1x!tpu.dma_semaphore, #tpu.memory_space<semaphore_mem>>
        %52 = tpu.memref_squeeze %51 : memref<1x!tpu.dma_semaphore, #tpu.memory_space<semaphore_mem>> -> memref<!tpu.dma_semaphore, #tpu.memory_space<semaphore_mem>>
        tpu.enqueue_dma source(%49 : memref<1x128xf32, #tpu.memory_space<any>>) target(%50 : memref<1x128xf32, #tpu.memory_space<vmem>>) target_semaphore(%52 : memref<!tpu.dma_semaphore, #tpu.memory_space<semaphore_mem>>)
      } else {
      }
    }
    %c16_i32_4 = arith.constant 16 : i32
    %c0 = arith.constant 0 : index
    %c0_5 = arith.constant 0 : index
    %3 = vector.load %arg2[%c0, %c0_5] : memref<16x1xi32, #tpu.memory_space<vmem>>, vector<16x1xi32>
    %c0_i32_6 = arith.constant 0 : i32
    %4 = vector.broadcast %c0_i32_6 : i32 to vector<16x1xi32>
    %5 = arith.cmpi ne, %3, %4 : vector<16x1xi32>
    %c0_7 = arith.constant 0 : index
    %c0_8 = arith.constant 0 : index
    %6 = vector.load %arg5[%c0_7, %c0_8] : memref<16x128xf32, #tpu.memory_space<vmem>>, vector<16x128xf32>
    %cst = arith.constant 0.000000e+00 : f32
    %7 = vector.shape_cast %5 : vector<16x1xi1> to vector<16x1xi1>
    %8 = vector.broadcast %7 : vector<16x1xi1> to vector<16x128xi1>
    %9 = vector.broadcast %cst : f32 to vector<16x128xf32>
    %10 = arith.select %8, %9, %6 : vector<16x128xi1>, vector<16x128xf32>
    %c0_9 = arith.constant 0 : index
    %c0_10 = arith.constant 0 : index
    %11 = vector.load %arg4[%c0_9, %c0_10] : memref<16x128xf32, #tpu.memory_space<vmem>>, vector<16x128xf32>
    tpu.vector_store %arg4[%c0_9, %c0_10], %10 {strides = array<i32>} : memref<16x128xf32, #tpu.memory_space<vmem>>, vector<16x128xf32>,
    return
  }
  func.func @transform_0(%arg0: i32, %arg1: memref<16xi32, #tpu.memory_space<smem>>) -> (i32, i32) {
    %c0_i32 = arith.constant 0 : i32
    %c0_i32_0 = arith.constant 0 : i32
    return %arg0, %c0_i32 : i32, i32
  }
  func.func @transform_2(%arg0: i32, %arg1: memref<16xi32, #tpu.memory_space<smem>>) -> (i32, i32) {
    %c0_i32 = arith.constant 0 : i32
    %c0_i32_0 = arith.constant 0 : i32
    return %arg0, %c0_i32 : i32, i32
  }
}

</mosaic_0001>

<llo_original>
// kernel: tpu_custom_call.1
$region0: #{tpu_custom_call.1}
  #allocation0 [shape = 'u32[]', space=smem, size = 0x4, offset = 0x4, fixed_abs, tag = 'smem constant byte address 0x4 - core index']
  #allocation1 [shape = 'u32[144,128]{1,0:T(1,128)}', space=vmem, size = 0x12000, scoped, tag = 'internal scratch']
  #allocation2 [shape = 'f32[16,128]{1,0:T(8,128)}', space=vmem, size = 0x2000, scoped, tag = 'scratch operand']
  #allocation3 [shape = 's32[8]{0}', space=sflag, size = 0x20, scoped, tag = 'scratch operand']
  #allocation4 [shape = 's32[1]{0}', space=sflag, size = 0x4, scoped, tag = 'scoped memory for tpu_custom_call.1']
  #allocation5 [shape = 'u8[512]{0}', space=smem, size = 0x200, scoped, tag = 'prefetched SMEM operand 0']
  #allocation8 [shape = 's32[]', space=sflag, size = 0x4, offset = 0, fixed_abs, tag = 'sflag constant byte address 0x0 - dummy sync flag']
  #allocation9 [shape = 's32[]', space=sflag, size = 0x4, offset = 0, fixed_abs, tag = 'sflag constant byte address 0x0 - dummy sync flag']
  #allocation10 [shape = 'u32[]', space=smem, size = 0x4, offset = 0x44, fixed_abs, tag = 'smem constant byte address 0x44 - assertion arg 0']
  #allocation11 [shape = 'u32[]', space=smem, size = 0x4, offset = 0x48, fixed_abs, tag = 'smem constant byte address 0x48 - assertion arg 1']
  #allocation12 [shape = 's32[]', space=sflag, size = 0x4, offset = 0, fixed_abs, tag = 'sflag constant byte address 0x0 - dummy sync flag']
  #allocation13 [shape = 's32[]', space=sflag, size = 0x4, offset = 0, fixed_abs, tag = 'sflag constant byte address 0x0 - dummy sync flag']
  %s0 = inlined_call_operand.vmem [shape: s32[16], index: 0, kind: input, shape index: {}]
  %s1 = inlined_call_operand.vmem [shape: s32[16,1], index: 1, kind: input, shape index: {}]
  %s2 = inlined_call_operand.hbm [shape: f32[64,128], index: 2, kind: input, shape index: {}]
  %s3 = inlined_call_operand.hbm [shape: f32[16,128], index: 3, kind: output, shape index: {}]
  %s4 = sld [smem:[#allocation0]]
  $region40: #{tpu_custom_call.1} parent=0
    _
  %s6 = ssub.s32 1, %s4
  %s7 = scalar_select 0, %s6, %s4
  %s8 = sshll.u32 %s0, 4
  %s9 = int_to_ptr.vmem [resolvable:$true] %s8
  %11 = dma.vmem_to_smem %s9, 16, [#allocation5], [#allocation4]
  %12 = dma.done [#allocation4], 16
  %13 = sfence
  $region1: #{tpu_custom_call.1} parent=0
    #allocation6 [shape = 'u8[8192]{0}', space=vmem, size = 0x2000, scoped, tag = 'output window, operand 0, single buffered']
    #allocation7 [shape = 's32[1]{0}', space=sflag, size = 0x4, scoped, tag = 'scoped memory for tpu_custom_call.1']
    %14 = vsyncpa [#allocation7], 0
    // Predicated region
    $region2: #{tpu_custom_call.1} parent=1 // pred_check
      _
    $region3: #{tpu_custom_call.1} parent=1 // pred_check_branch
      %16 = sbr.rel (0) target = $region5
    $region4: #{tpu_custom_call.1} parent=1 // pred_region
      _
    $region5: #{tpu_custom_call.1} parent=1 // pred_fallthru
      _
    %s17 = smul.u32 0, 16
    loop: start=0, step=1, limit=8
    $region6: #{tpu_custom_call.1} parent=1 // loop_pre_header
      _
    $region7: #{tpu_custom_call.1} parent=1 // loop_header
      %s19 = sphi 0, %s23
      %p20 = scmp.ge.s32.totalorder %s19, 8
    $region8: #{tpu_custom_call.1} parent=1 // loop_header_branch
      %22 = sbr.rel (%p20) target = $region12
    $region9: #{tpu_custom_call.1} parent=1 // loop_body
      %s24 = sadd.s32 %s17, %s19
      %s25 = sld [smem:[#allocation5 + %s24]]
      %p26 = scmp.lt.s32.totalorder %s19, 0
      %s27 = ssub.s32 0, %s19
      %s28 = scalar_select %p26, %s27, %s19
      %s29 = sand.u32 %s28, 7
      %s30 = ssub.s32 0, %s29
      %s31 = scalar_select %p26, %s30, %s29
      %p32 = scmp.ne.s32.totalorder %s31, 0
      %p33 = scmp.lt.s32.totalorder %s31, 0
      %p34 = pnand %p33, %p32
      %p35 = pneg %p34
      %s36 = sadd.s32 %s31, 8
      %s37 = scalar_select %p35, %s36, %s31
      %s38 = smul.addr %s25, 16
      %s39 = scalar_lea.hbm %s2, %s38
      %s40 = scalar_lea.vmem [#allocation2], %s19
      %s41 = scalar_lea.sflag [#allocation3], %s37
      // Predicated region
      $region13: #{tpu_custom_call.1} parent=9 // pred_check
        _
      $region14: #{tpu_custom_call.1} parent=9 // pred_check_branch
        %43 = sbr.rel target = $region16
      $region15: #{tpu_custom_call.1} parent=9 // pred_region
        %44 = sst [smem:[#allocation10]] [#allocation9]
        %45 = sst [smem:[#allocation11]] [#allocation8]
      $region16: #{tpu_custom_call.1} parent=9 // pred_fallthru
        _
      %47 = shalt.err (0)
      %s49 = sshll.u32 %s40, 4
      %s50 = int_to_ptr.vmem [resolvable:$true] %s49
      %52 = dma.hbm_to_vmem [thread:$0]  %s39, 16, %s50, %s41
    $region10: #{tpu_custom_call.1} parent=1 // loop_footer
      %s23 = sadd.s32 1, %s19
    $region11: #{tpu_custom_call.1} parent=1 // loop_footer_branch
      %18 = sbr.rel target = $region7
    $region12: #{tpu_custom_call.1} parent=1 // loop_exit
      _
    loop: start=0, step=1, limit=16
    $region17: #{tpu_custom_call.1} parent=1 // loop_pre_header
      _
    $region18: #{tpu_custom_call.1} parent=1 // loop_header
      %s54 = sphi 0, %s58
      %p55 = scmp.ge.s32.totalorder %s54, 16
    $region19: #{tpu_custom_call.1} parent=1 // loop_header_branch
      %57 = sbr.rel (%p55) target = $region23
    $region20: #{tpu_custom_call.1} parent=1 // loop_body
      %s59 = sadd.s32 %s17, %s54
      %s60 = sld [smem:[#allocation5 + %s59]]
      %p61 = scmp.lt.s32.totalorder %s54, 0
      %s62 = ssub.s32 0, %s54
      %s63 = scalar_select %p61, %s62, %s54
      %s64 = sand.u32 %s63, 7
      %s65 = ssub.s32 0, %s64
      %s66 = scalar_select %p61, %s65, %s64
      %p67 = scmp.ne.s32.totalorder %s66, 0
      %p68 = scmp.lt.s32.totalorder %s66, 0
      %p69 = pnand %p68, %p67
      %p70 = pneg %p69
      %s71 = sadd.s32 %s66, 8
      %s72 = scalar_select %p70, %s71, %s66
      %s73 = scalar_lea.sflag [#allocation3], %s72
      %s74 = smul.u32 1, 1
      %s75 = sshll.u32 %s74, 4
      %76 = dma.done %s73, %s75
      %s77 = sadd.s32 %s54, 8
      %p78 = scmp.lt.s32.totalorder %s77, 16
      // Predicated region
      $region24: #{tpu_custom_call.1} parent=20 // pred_check
        %p79 = pneg %p78
      $region25: #{tpu_custom_call.1} parent=20 // pred_check_branch
        %81 = sbr.rel (%p79) target = $region27
      $region26: #{tpu_custom_call.1} parent=20 // pred_region
        %s82 = sadd.s32 %s17, %s77
        %s83 = sld [smem:[#allocation5 + %s82]]
        %p84 = scmp.lt.s32.totalorder %s77, 0
        %s85 = ssub.s32 0, %s77
        %s86 = scalar_select %p84, %s85, %s77
        %s87 = sand.u32 %s86, 7
        %s88 = ssub.s32 0, %s87
        %s89 = scalar_select %p84, %s88, %s87
        %p90 = scmp.ne.s32.totalorder %s89, 0
        %p91 = scmp.lt.s32.totalorder %s89, 0
        %p92 = pnand %p91, %p90
        %p93 = pneg %p92
        %s94 = sadd.s32 %s89, 8
        %s95 = scalar_select %p93, %s94, %s89
        %s96 = smul.addr %s83, 16
        %s97 = scalar_lea.hbm %s2, %s96
        %s98 = scalar_lea.vmem [#allocation2], %s77
        %s99 = scalar_lea.sflag [#allocation3], %s95
        // Predicated region
        $region28: #{tpu_custom_call.1} parent=26 // pred_check
          _
        $region29: #{tpu_custom_call.1} parent=26 // pred_check_branch
          %101 = sbr.rel target = $region31
        $region30: #{tpu_custom_call.1} parent=26 // pred_region
          %102 = sst [smem:[#allocation10]] [#allocation13]
          %103 = sst [smem:[#allocation11]] [#allocation12]
        $region31: #{tpu_custom_call.1} parent=26 // pred_fallthru
          _
        %105 = shalt.err (0)
        %s107 = sshll.u32 %s98, 4
        %s108 = int_to_ptr.vmem [resolvable:$true] %s107
        %110 = dma.hbm_to_vmem [thread:$0]  %s97, 16, %s108, %s99
      $region27: #{tpu_custom_call.1} parent=20 // pred_fallthru
        _
    $region21: #{tpu_custom_call.1} parent=1 // loop_footer
      %s58 = sadd.s32 1, %s54
    $region22: #{tpu_custom_call.1} parent=1 // loop_footer_branch
      %53 = sbr.rel target = $region18
    $region23: #{tpu_custom_call.1} parent=1 // loop_exit
      _
    %v111 = vld [vmem:[%s1] sm:$0xff]
    %v112 = vld [vmem:[%s1 + $0x8] sm:$0xff]
    %vm113 = vcmp.ne.s32.totalorder %v111, 0
    %vm114 = vcmp.ne.s32.totalorder %v112, 0
    %v115 = vld [vmem:[#allocation2] sm:$0xff]
    %v116 = vld [vmem:[#allocation2 + $0x8] sm:$0xff]
    %v117 = vsel %vm113, 1, 0
    %v118 = vsel %vm114, 1, 0
    %119 = vset.pattern.permute.xlu0 0
    %120 = vperm.xlu0 %119, %v117
    %v121 = vpop.permute.xlu0 %120
    %122 = vset.pattern.permute.xlu0 0
    %123 = vperm.xlu0 %122, %v118
    %v124 = vpop.permute.xlu0 %123
    %vm125 = vcmp.eq.s32.totalorder %v121, 1
    %vm126 = vcmp.eq.s32.totalorder %v124, 1
    %v127 = vsel %vm125, 0.0, %v115
    %v128 = vsel %vm126, 0.0, %v116
    %129 = vst [vmem:[#allocation6] sm:$0xff] %v127
    %130 = vst [vmem:[#allocation6 + $0x8] sm:$0xff] %v128
    // Predicated region
    $region32: #{tpu_custom_call.1} parent=1 // pred_check
      _
    $region33: #{tpu_custom_call.1} parent=1 // pred_check_branch
      %132 = sbr.rel (0) target = $region35
    $region34: #{tpu_custom_call.1} parent=1 // pred_region
      %s134 = ssub.s32 256, 256
      %135 = vsyncadd [#allocation7], %s134
      %s136 = sshll.u32 [#allocation6], 4
      %s137 = int_to_ptr.vmem [resolvable:$true] %s136
      %142 = dma.vmem_to_hbm [thread:$0]  %s137, 256, %s3, [#allocation7], 128, 128, 8
    $region35: #{tpu_custom_call.1} parent=1 // pred_fallthru
      _
    // Predicated region
    $region36: #{tpu_custom_call.1} parent=1 // pred_check
      _
    $region37: #{tpu_custom_call.1} parent=1 // pred_check_branch
      %144 = sbr.rel (0) target = $region39
    $region38: #{tpu_custom_call.1} parent=1 // pred_region
      %145 = dma.done [#allocation7], 256
    $region39: #{tpu_custom_call.1} parent=1 // pred_fallthru
      _
    %146 = vsyncpa [#allocation7], 1
  %147 = vsyncmov [#allocation3]
  %s148 = vpop.sfrf %147
  %p149 = scmp.eq.s32.totalorder %s148, 0
  %p150 = pneg %p149
  %152 = shalt.err (%p150)
  %s153 = scalar_lea.sflag [#allocation3], 1
  %154 = vsyncmov %s153
  %s155 = vpop.sfrf %154
  %p156 = scmp.eq.s32.totalorder %s155, 0
  %p157 = pneg %p156
  %159 = shalt.err (%p157)
  %s160 = scalar_lea.sflag [#allocation3], 2
  %161 = vsyncmov %s160
  %s162 = vpop.sfrf %161
  %p163 = scmp.eq.s32.totalorder %s162, 0
  %p164 = pneg %p163
  %166 = shalt.err (%p164)
  %s167 = scalar_lea.sflag [#allocation3], 3
  %168 = vsyncmov %s167
  %s169 = vpop.sfrf %168
  %p170 = scmp.eq.s32.totalorder %s169, 0
  %p171 = pneg %p170
  %173 = shalt.err (%p171)
  %s174 = scalar_lea.sflag [#allocation3], 4
  %175 = vsyncmov %s174
  %s176 = vpop.sfrf %175
  %p177 = scmp.eq.s32.totalorder %s176, 0
  %p178 = pneg %p177
  %180 = shalt.err (%p178)
  %s181 = scalar_lea.sflag [#allocation3], 5
  %182 = vsyncmov %s181
  %s183 = vpop.sfrf %182
  %p184 = scmp.eq.s32.totalorder %s183, 0
  %p185 = pneg %p184
  %187 = shalt.err (%p185)
  %s188 = scalar_lea.sflag [#allocation3], 6
  %189 = vsyncmov %s188
  %s190 = vpop.sfrf %189
  %p191 = scmp.eq.s32.totalorder %s190, 0
  %p192 = pneg %p191
  %194 = shalt.err (%p192)
  %s195 = scalar_lea.sflag [#allocation3], 7
  %196 = vsyncmov %s195
  %s197 = vpop.sfrf %196
  %p198 = scmp.eq.s32.totalorder %s197, 0
  %p199 = pneg %p198
  %201 = shalt.err (%p199)

</llo_original>
